<compile_context>
chip_gen: v5e
topology: v5e:2x2
jax: 0.10.0
libtpu: 0.0.40
codegen_flags: <defaults>
</compile_context>

<pallas_src>
import jax
import jax.numpy as jnp
from jax.experimental import pallas as pl
from jax.experimental.pallas import tpu as pltpu

PACT_DEFAULT_BITS = 4  # stand-in for config.pact_bits


def _pact_kernel(scalars_ref, x_ref, o_ref):
    # scalars_ref: SMEM f32[2] = [alpha, scale]; x_ref/o_ref: VMEM tiles.
    alpha = scalars_ref[0]
    scale = scalars_ref[1]
    x = x_ref[...].astype(jnp.float32)     # f32 math; HBM traffic stays at input dtype
    clamped = jnp.clip(x, 0.0, alpha)
    # Identical formulation to torch (round-half-to-even, then divide). The divide is
    # hidden under DMA for this memory-bound kernel, so no reciprocal trick is needed.
    q = jnp.round(clamped * scale) / scale
    o_ref[...] = q.astype(o_ref.dtype)


def _sublane_multiple(dtype) -> int:
    """Native sublane packing multiple for the dtype: 8 (32-bit), 16 (16-bit), 32 (8-bit)."""
    itemsize = jnp.dtype(dtype).itemsize
    if itemsize >= 4:
        return 8
    if itemsize == 2:
        return 16
    return 32


def _choose_lane(n: int):
    for cand in (1024, 512, 256, 128):
        if n % cand == 0:
            return cand
    return None


def _choose_tile_rows(rows: int, lane: int, dtype_bytes: int,
                      sublane_mult: int, target_block_bytes: int) -> int:
    """Pick tile_rows: sublane-aligned, <= target bytes, dividing rows exactly if possible,
    and giving >= 2 tiles (even count preferred) so both v7x TensorCores participate."""
    max_rows = target_block_bytes // (lane * dtype_bytes)
    max_rows = max(sublane_mult, (max_rows // sublane_mult) * sublane_mult)

    if rows <= sublane_mult:
        # Tiny input: single full-extent block (allowed even if not a multiple of 8).
        return rows

    # Exact divisors of rows that are sublane multiples and yield >= 2 tiles.
    hi = min(max_rows, rows // 2)
    candidates = [t for t in range(sublane_mult, hi + 1, sublane_mult) if rows % t == 0]
    if candidates:
        even = [t for t in candidates if (rows // t) % 2 == 0]
        return max(even) if even else max(candidates)

    # Fallback: ragged last block, but still >= 2 tiles and sublane-aligned.
    half = (rows + 1) // 2
    t = min(max_rows, ((half + sublane_mult - 1) // sublane_mult) * sublane_mult)
    if t >= rows:
        t = max(sublane_mult, ((rows // 2) // sublane_mult) * sublane_mult)
    return t


def pact_forward(x: jnp.ndarray, alpha: jnp.ndarray, bits: int,
                 *, donate_input: bool = False) -> jnp.ndarray:
    """PACT forward. x: any shape (e.g. NCHW), alpha: scalar parameter."""
    orig_shape = x.shape
    orig_dtype = x.dtype
    n = x.size

    # --- scalar parameters, derived in float32 (correctness even for bf16 inputs) ---
    levels = float(2 ** bits - 1)
    alpha_f32 = jnp.asarray(alpha, dtype=jnp.float32).reshape(())
    scale = levels / alpha_f32
    scalars = jnp.stack([alpha_f32, scale])  # f32[2] -> SMEM

    # --- lane-dense 2-D layout, no padding whenever the element count allows ---
    lane = _choose_lane(n)
    x_flat = x.reshape(-1)
    if lane is None:
        lane = 128
        padded_n = -(-n // lane) * lane
        x_flat = jnp.pad(x_flat, (0, padded_n - n))   # tiny/odd inputs only
    else:
        padded_n = n
    rows = padded_n // lane
    x2d = x_flat.reshape(rows, lane)

    # --- tile sizing: ~8 MiB blocks, dtype-aware sublane alignment, >=2 (even) tiles ---
    dtype_bytes = jnp.dtype(orig_dtype).itemsize
    sublane_mult = _sublane_multiple(orig_dtype)
    target_block_bytes = 8 * 1024 * 1024
    tile_rows = _choose_tile_rows(rows, lane, dtype_bytes, sublane_mult, target_block_bytes)
    num_tiles = pl.cdiv(rows, tile_rows)

    call_kwargs = {}
    if donate_input:
        # 1:1 elementwise map with identical index maps -> safe to write the result
        # over the (donated) input buffer; saves one HBM allocation.
        call_kwargs["input_output_aliases"] = {1: 0}

    out2d = pl.pallas_call(
        _pact_kernel,
        out_shape=jax.ShapeDtypeStruct((rows, lane), orig_dtype),
        grid=(num_tiles,),
        in_specs=[
            pl.BlockSpec(memory_space=pltpu.SMEM),              # [alpha, scale]
            pl.BlockSpec((tile_rows, lane), lambda i: (i, 0)),  # input tile
        ],
        out_specs=pl.BlockSpec((tile_rows, lane), lambda i: (i, 0)),
        compiler_params=pltpu.CompilerParams(
            dimension_semantics=("parallel",),          # shard tiles across TCs (v7x)
            vmem_limit_bytes=48 * 1024 * 1024,          # explicit; > v5e/v6e scoped default,
                                                        # well below v7x 64 MiB physical VMEM
        ),
        **call_kwargs,
    )(scalars, x2d)

    out_flat = out2d.reshape(-1)
    if padded_n != n:
        out_flat = out_flat[:n]
    return out_flat.reshape(orig_shape)


class PactPallas:
    """Mirror of the PyTorch Pact module (forward pass only)."""
    # TODO(synk): PactActFn.backward (straight-through grad for x, sum-grad for alpha)
    # is not implemented here; forward pass only.

    def __init__(self, bits=None):
        self.alpha = jnp.asarray(10.0, dtype=jnp.float32)  # nn.Parameter(tensor(10.0))
        self.bits = bits or PACT_DEFAULT_BITS

    def __call__(self, x):
        return pact_forward(x, self.alpha, self.bits)


def _reference(x, alpha, bits):
    scale = (2 ** bits - 1) / jnp.asarray(alpha, jnp.float32)
    return (jnp.round(jnp.clip(x.astype(jnp.float32), 0.0, alpha) * scale) / scale).astype(x.dtype)


if __name__ == "__main__":
    key = jax.random.PRNGKey(0)
    module = PactPallas(bits=4)

    # Small NCHW input consistent with a conv-style activation (spans [0, alpha] and beyond).
    x = jax.random.normal(key, (2, 4, 16, 16), dtype=jnp.float32) * 6.0
    y = jax.block_until_ready(module(x))
    y_ref = _reference(x, module.alpha, module.bits)
    assert y.shape == x.shape and y.dtype == x.dtype
    assert jnp.allclose(y, y_ref, atol=1e-6), "mismatch vs reference (NCHW f32)"

    # Odd-sized input exercises the padded fallback path.
    x_odd = jax.random.normal(jax.random.PRNGKey(1), (3, 7, 5), dtype=jnp.float32) * 12.0
    y_odd = jax.block_until_ready(module(x_odd))
    y_odd_ref = _reference(x_odd, module.alpha, module.bits)
    assert y_odd.shape == x_odd.shape
    assert jnp.allclose(y_odd, y_odd_ref, atol=1e-6), "mismatch vs reference (odd shape)"

    print("KERNEL_OK")
</pallas_src>

<mosaic_0001>
module attributes {stable_mosaic.version = 11 : i64} {
  func.func @_pact_kernel(%arg0: i32, %arg1: memref<2xf32, #tpu.memory_space<smem>>, %arg2: memref<2x1024xf32, #tpu.memory_space<vmem>>, %arg3: memref<2x1024xf32, #tpu.memory_space<vmem>>) attributes {dimension_semantics = [#tpu.dimension_semantics<parallel>], iteration_bounds = array<i64: 1>, scalar_prefetch = 0 : i64, scratch_operands = 0 : i64, tpu.core_type = #tpu.core_type<tc>, window_params = [{transform_indices = @transform_0, window_bounds = array<i64: 2>}, {transform_indices = @transform_1, window_bounds = array<i64: 2, 1024>}, {transform_indices = @transform_2, window_bounds = array<i64: 2, 1024>}]} {
    %c0 = arith.constant 0 : index
    %0 = memref.load %arg1[%c0] : memref<2xf32, #tpu.memory_space<smem>>
    %c1 = arith.constant 1 : index
    %1 = memref.load %arg1[%c1] : memref<2xf32, #tpu.memory_space<smem>>
    %c0_0 = arith.constant 0 : index
    %c0_1 = arith.constant 0 : index
    %2 = vector.load %arg2[%c0_0, %c0_1] : memref<2x1024xf32, #tpu.memory_space<vmem>>, vector<2x1024xf32>
    %cst = arith.constant 0.000000e+00 : f32
    %3 = vector.broadcast %cst : f32 to vector<2x1024xf32>
    %4 = arith.maximumf %3, %2 : vector<2x1024xf32>
    %5 = vector.broadcast %0 : f32 to vector<2x1024xf32>
    %6 = arith.minimumf %5, %4 : vector<2x1024xf32>
    %7 = vector.broadcast %1 : f32 to vector<2x1024xf32>
    %8 = arith.mulf %6, %7 : vector<2x1024xf32>
    %9 = math.roundeven %8 : vector<2x1024xf32>
    %10 = vector.broadcast %1 : f32 to vector<2x1024xf32>
    %11 = arith.divf %9, %10 : vector<2x1024xf32>
    %c0_2 = arith.constant 0 : index
    %c0_3 = arith.constant 0 : index
    %12 = vector.load %arg3[%c0_2, %c0_3] : memref<2x1024xf32, #tpu.memory_space<vmem>>, vector<2x1024xf32>
    tpu.vector_store %arg3[%c0_2, %c0_3], %11 {strides = array<i32>} : memref<2x1024xf32, #tpu.memory_space<vmem>>, vector<2x1024xf32>,
    return
  }
  func.func @transform_0(%arg0: i32) -> i32 {
    %c0_i32 = arith.constant 0 : i32
    %c0_i32_0 = arith.constant 0 : i32
    return %c0_i32 : i32
  }
  func.func @transform_1(%arg0: i32) -> (i32, i32) {
    %c0_i32 = arith.constant 0 : i32
    %c0_i32_0 = arith.constant 0 : i32
    return %arg0, %c0_i32 : i32, i32
  }
  func.func @transform_2(%arg0: i32) -> (i32, i32) {
    %c0_i32 = arith.constant 0 : i32
    %c0_i32_0 = arith.constant 0 : i32
    return %arg0, %c0_i32 : i32, i32
  }
}

</mosaic_0001>

<llo_original>
// kernel: tpu_custom_call.1
$region0: #{tpu_custom_call.1}
  #allocation0 [shape = 'u32[]', space=smem, size = 0x4, offset = 0x4, fixed_abs, tag = 'smem constant byte address 0x4 - core index']
  #allocation1 [shape = 'u32[72,128]{1,0:T(1,128)}', space=vmem, size = 0x9000, scoped, tag = 'internal scratch']
  %s0 = inlined_call_operand.hbm [shape: f32[2], index: 0, kind: input, shape index: {}]
  %s1 = inlined_call_operand.hbm [shape: f32[2,1024], index: 1, kind: input, shape index: {}]
  %s2 = inlined_call_operand.hbm [shape: f32[2,1024], index: 2, kind: output, shape index: {}]
  %s3 = sld [smem:[#allocation0]]
  $region26: #{tpu_custom_call.1} parent=0
    _
  %s5 = ssub.s32 1, %s3
  %s6 = scalar_select 0, %s5, %s3
  $region1: #{tpu_custom_call.1} parent=0
    #allocation2 [shape = 'u8[512]{0}', space=smem, size = 0x200, scoped, tag = 'input window, operand 0, single buffered']
    #allocation3 [shape = 's32[1]{0}', space=sflag, size = 0x4, scoped, tag = 'scoped memory for tpu_custom_call.1']
    #allocation4 [shape = 's32[1]{0}', space=sflag, size = 0x4, scoped, tag = 'scoped memory for tpu_custom_call.1']
    #allocation5 [shape = 's32[1]{0}', space=sflag, size = 0x4, scoped, tag = 'scoped memory for tpu_custom_call.1']
    #allocation6 [shape = 'u8[8192]{0}', space=vmem, size = 0x2000, scoped, tag = 'input window, operand 1, single buffered']
    #allocation7 [shape = 'u8[8192]{0}', space=vmem, size = 0x2000, scoped, tag = 'output window, operand 0, single buffered']
    %7 = vsyncpa [#allocation5], 0
    %8 = vsyncpa [#allocation3], 0
    %9 = vsyncpa [#allocation4], 0
    // Predicated region
    $region2: #{tpu_custom_call.1} parent=1 // pred_check
      _
    $region3: #{tpu_custom_call.1} parent=1 // pred_check_branch
      %11 = sbr.rel (0) target = $region5
    $region4: #{tpu_custom_call.1} parent=1 // pred_region
      %13 = vsyncadd [#allocation5], 0
      %s15 = sshll.u32 %s0, 4
      %s16 = int_to_ptr.hbm [resolvable:$true] %s15
      %18 = dma.hbm_to_smem %s16, 16, [#allocation2], [#allocation5]
    $region5: #{tpu_custom_call.1} parent=1 // pred_fallthru
      _
    // Predicated region
    $region6: #{tpu_custom_call.1} parent=1 // pred_check
      _
    $region7: #{tpu_custom_call.1} parent=1 // pred_check_branch
      %20 = sbr.rel (0) target = $region9
    $region8: #{tpu_custom_call.1} parent=1 // pred_region
      %22 = vsyncadd [#allocation3], 0
      %s24 = sshll.u32 %s1, 4
      %s25 = int_to_ptr.hbm [resolvable:$true] %s24
      %s26 = sshll.u32 [#allocation6], 4
      %s27 = int_to_ptr.vmem [resolvable:$true] %s26
      %29 = dma.hbm_to_vmem [thread:$0]  %s25, 256, %s27, [#allocation3]
    $region9: #{tpu_custom_call.1} parent=1 // pred_fallthru
      _
    // Predicated region
    $region10: #{tpu_custom_call.1} parent=1 // pred_check
      _
    $region11: #{tpu_custom_call.1} parent=1 // pred_check_branch
      %31 = sbr.rel (0) target = $region13
    $region12: #{tpu_custom_call.1} parent=1 // pred_region
      %33 = dma.done [#allocation5], 16
    $region13: #{tpu_custom_call.1} parent=1 // pred_fallthru
      _
    // Predicated region
    $region14: #{tpu_custom_call.1} parent=1 // pred_check
      _
    $region15: #{tpu_custom_call.1} parent=1 // pred_check_branch
      %35 = sbr.rel (0) target = $region17
    $region16: #{tpu_custom_call.1} parent=1 // pred_region
      %37 = dma.done [#allocation3], 256
    $region17: #{tpu_custom_call.1} parent=1 // pred_fallthru
      _
    %38 = sfence
    %s39 = sld [smem:[#allocation2]]
    %s40 = sld [smem:[#allocation2 + $0x1]]
    %v41 = vld [vmem:[#allocation6] sm:$0xff]
    %v42 = vld [vmem:[#allocation6 + $0x8] sm:$0xff]
    %v43 = vmax.f32 %v41, 0.0
    %v44 = vmax.f32 %v42, 0.0
    %v45 = vstv %s39
    %v46 = vmin.f32 %v45, %v43
    %v47 = vmin.f32 %v45, %v44
    %v48 = vstv %s40
    %v49 = vmul.f32 %v46, %v48
    %v50 = vmul.f32 %v47, %v48
    %v51 = vround.ne.pseudo %v49
    %v52 = vround.ne.pseudo %v50
    %v53 = vrcp.pop %v48
    %v54 = vmul.f32 %v48, %v53
    %v55 = vsub.f32 1.0, %v54
    %v56 = vmul.f32 %v53, %v55
    %v57 = vadd.f32 %v53, %v56
    %vm58 = vweird.f32 %v48
    %vm59 = vweird.f32 %v53
    %vm60 = vmor %vm58, %vm59
    %v61 = vsel %vm60, %v53, %v57
    %v62 = vand.u32 2147483647, %v48
    %vm63 = vcmp.eq.f32.partialorder %v62, 8.507059e+37
    %v64 = vand.u32 %v48, 2147483648
    %v65 = vor.u32 1.1754944e-38, %v64
    %v66 = vsel %vm63, %v65, %v61
    %v67 = vmul.f32 %v51, %v66
    %v68 = vmul.f32 %v52, %v66
    %69 = vst [vmem:[#allocation7] sm:$0xff] %v67
    %70 = vst [vmem:[#allocation7 + $0x8] sm:$0xff] %v68
    // Predicated region
    $region18: #{tpu_custom_call.1} parent=1 // pred_check
      _
    $region19: #{tpu_custom_call.1} parent=1 // pred_check_branch
      %72 = sbr.rel (0) target = $region21
    $region20: #{tpu_custom_call.1} parent=1 // pred_region
      %74 = vsyncadd [#allocation4], 0
      %s76 = sshll.u32 [#allocation7], 4
      %s77 = int_to_ptr.vmem [resolvable:$true] %s76
      %s78 = sshll.u32 %s2, 4
      %s79 = int_to_ptr.hbm [resolvable:$true] %s78
      %81 = dma.vmem_to_hbm [thread:$0]  %s77, 256, %s79, [#allocation4]
    $region21: #{tpu_custom_call.1} parent=1 // pred_fallthru
      _
    // Predicated region
    $region22: #{tpu_custom_call.1} parent=1 // pred_check
      _
    $region23: #{tpu_custom_call.1} parent=1 // pred_check_branch
      %83 = sbr.rel (0) target = $region25
    $region24: #{tpu_custom_call.1} parent=1 // pred_region
      %85 = dma.done [#allocation4], 256
    $region25: #{tpu_custom_call.1} parent=1 // pred_fallthru
      _
    %86 = vsyncpa [#allocation3], 1
    %87 = vsyncpa [#allocation4], 1
    %88 = vsyncpa [#allocation5], 1

</llo_original>
